<compile_context>
chip_gen: v5e
topology: v5e:2x2
jax: 0.10.0
libtpu: 0.0.40
codegen_flags: <defaults>
</compile_context>

<pallas_src>
import jax
import jax.numpy as jnp
from jax.experimental import pallas as pl
from jax.experimental.pallas import tpu as pltpu


def _round_up(x: int, m: int) -> int:
    return ((x + m - 1) // m) * m


def pgn_kernel(xt_ref, w1t_ref, b1t_ref, w2t_ref, b2t_ref, ot_ref):
    # xt_ref : (in_size, tb)   f32   (batch on lanes)
    # w1t_ref: (hidden, in_size) f32
    # b1t_ref: (hidden, 1)     f32
    # w2t_ref: (n_pad, hidden) f32   (n_actions padded to 8 sublanes)
    # b2t_ref: (n_pad, 1)      f32
    # ot_ref : (n_pad, tb)     f32
    xt = xt_ref[...]
    w1t = w1t_ref[...]
    in_size = xt.shape[0]
    tb = xt.shape[1]
    hidden = w1t.shape[0]

    # ----- Layer 1 on the VPU: h^T = W1^T x^T + b1, as `in_size` broadcast FMAs.
    acc = jnp.broadcast_to(b1t_ref[...], (hidden, tb))   # hoisted broadcast
    for k in range(in_size):                              # static unroll (in=4)
        acc = acc + w1t[:, k:k + 1] * xt[k:k + 1, :]      # (128,1)*(1,tb)
    h_t = jnp.maximum(acc, 0.0)                           # (hidden, tb)

    # ----- Layer 2 on the MXU (f32): out^T = W2^T h^T + b2, result (8, tb).
    out_t = jnp.dot(w2t_ref[...], h_t, preferred_element_type=jnp.float32)
    ot_ref[...] = (out_t + b2t_ref[...]).astype(ot_ref.dtype)


def prepare_pgn_params(w1, b1, w2, b2):
    """One-time parameter prep (transpose / pad / cast), hoisted out of forward."""
    hidden = w1.shape[1]
    n_actions = w2.shape[1]
    n_pad = _round_up(n_actions, 8)                     # sublane-aligned outputs
    w1t = jnp.asarray(w1, jnp.float32).T                # (hidden, in_size)
    b1t = jnp.asarray(b1, jnp.float32).reshape(hidden, 1)
    w2t = jnp.pad(jnp.asarray(w2, jnp.float32).T,       # (n_pad, hidden)
                  ((0, n_pad - n_actions), (0, 0)))
    b2t = jnp.pad(jnp.asarray(b2, jnp.float32).reshape(n_actions, 1),
                  ((0, n_pad - n_actions), (0, 0)))
    return (w1t, b1t, w2t, b2t, n_actions)


def _choose_tile(batch: int, block_b: int) -> int:
    num_steps = max(1, -(-batch // block_b))
    if batch >= 256:
        # v7x megacore: keep >= 2 grid steps so both TensorCores get work.
        num_steps = max(num_steps, 2)
    # Round per-step rows up to 128 (lane-dense blocks on the batch/lane axis);
    # choosing tb from num_steps bounds padding waste for awkward batch sizes.
    return _round_up(-(-batch // num_steps), 128)


def pgn_forward(x, prepped, *, block_b: int = 1024):
    """Fused MLP forward: x (B, in_size) -> logits (B, n_actions)."""
    w1t, b1t, w2t, b2t, n_actions = prepped
    B, in_size = x.shape
    hidden, n_pad = w1t.shape[0], w2t.shape[0]

    tb = _choose_tile(B, block_b)
    b_pad = _round_up(B, tb)

    # Per-call input prep: transpose so batch is on the lane axis, pad lanes.
    x_t = jnp.pad(jnp.asarray(x, jnp.float32).T, ((0, 0), (0, b_pad - B)))

    grid = (b_pad // tb,)
    out_t = pl.pallas_call(
        pgn_kernel,
        out_shape=jax.ShapeDtypeStruct((n_pad, b_pad), jnp.float32),
        grid=grid,
        in_specs=[
            pl.BlockSpec((in_size, tb), lambda i: (0, i)),    # x^T: tiled over B
            pl.BlockSpec((hidden, in_size), lambda i: (0, 0)),  # w1^T: resident
            pl.BlockSpec((hidden, 1), lambda i: (0, 0)),         # b1^T: resident
            pl.BlockSpec((n_pad, hidden), lambda i: (0, 0)),     # w2^T: resident
            pl.BlockSpec((n_pad, 1), lambda i: (0, 0)),          # b2^T: resident
        ],
        out_specs=pl.BlockSpec((n_pad, tb), lambda i: (0, i)),
        compiler_params=pltpu.CompilerParams(
            dimension_semantics=("parallel",)),
    )(x_t, w1t, b1t, w2t, b2t)

    # Tiny (8, B) slab -> (B, n_actions); negligible vs the old 128-wide slice.
    return out_t[:n_actions, :B].T


def init_pgn_params(key, input_size, n_actions, hidden=128):
    """Deterministic init mimicking torch.nn.Linear (uniform +/- 1/sqrt(fan_in))."""
    k1, k2, k3, k4 = jax.random.split(key, 4)
    bound1 = 1.0 / jnp.sqrt(jnp.float32(input_size))
    bound2 = 1.0 / jnp.sqrt(jnp.float32(hidden))
    w1 = jax.random.uniform(k1, (input_size, hidden), jnp.float32, -bound1, bound1)
    b1 = jax.random.uniform(k2, (hidden,), jnp.float32, -bound1, bound1)
    w2 = jax.random.uniform(k3, (hidden, n_actions), jnp.float32, -bound2, bound2)
    b2 = jax.random.uniform(k4, (n_actions,), jnp.float32, -bound2, bound2)
    return w1, b1, w2, b2


def pgn_reference(x, w1, b1, w2, b2):
    h = jnp.maximum(
        jnp.dot(x, w1, precision=jax.lax.Precision.HIGHEST) + b1, 0.0)
    return jnp.dot(h, w2, precision=jax.lax.Precision.HIGHEST) + b2


if __name__ == "__main__":
    # CartPole dims: observation size 4, 2 actions; small batch.
    input_size, n_actions, batch = 4, 2, 8

    key = jax.random.PRNGKey(0)
    kx, kp, kb = jax.random.split(key, 3)
    x = jax.random.normal(kx, (batch, input_size), jnp.float32)
    w1, b1, w2, b2 = init_pgn_params(kp, input_size, n_actions)

    prepped = prepare_pgn_params(w1, b1, w2, b2)   # one-time, hoisted prep

    out = jax.block_until_ready(pgn_forward(x, prepped))
    ref = pgn_reference(x, w1, b1, w2, b2)
    assert out.shape == (batch, n_actions)
    assert jnp.allclose(out, ref, atol=2e-2, rtol=2e-2), "mismatch vs reference"

    # Rollout-sized batch: exercises the multi-step grid (>= 2 "parallel" steps
    # for megacore) and the lane-dense transposed layout.
    xb = jax.random.normal(kb, (1024, input_size), jnp.float32)
    outb = jax.block_until_ready(pgn_forward(xb, prepped))
    refb = pgn_reference(xb, w1, b1, w2, b2)
    assert outb.shape == (1024, n_actions)
    assert jnp.allclose(outb, refb, atol=2e-2, rtol=2e-2), "mismatch (tiled path)"

    print("KERNEL_OK")
</pallas_src>

<mosaic_0001>
module attributes {stable_mosaic.version = 11 : i64} {
  func.func @pgn_kernel(%arg0: i32, %arg1: memref<4x128xf32, #tpu.memory_space<vmem>>, %arg2: memref<128x4xf32, #tpu.memory_space<vmem>>, %arg3: memref<128x1xf32, #tpu.memory_space<vmem>>, %arg4: memref<8x128xf32, #tpu.memory_space<vmem>>, %arg5: memref<8x1xf32, #tpu.memory_space<vmem>>, %arg6: memref<8x128xf32, #tpu.memory_space<vmem>>) attributes {dimension_semantics = [#tpu.dimension_semantics<parallel>], iteration_bounds = array<i64: 1>, scalar_prefetch = 0 : i64, scratch_operands = 0 : i64, tpu.core_type = #tpu.core_type<tc>, window_params = [{transform_indices = @transform_0, window_bounds = array<i64: 4, 128>}, {pipeline_mode = #tpu.pipeline_mode<synchronous>, transform_indices = @transform_1, window_bounds = array<i64: 128, 4>}, {pipeline_mode = #tpu.pipeline_mode<synchronous>, transform_indices = @transform_2, window_bounds = array<i64: 128, 1>}, {pipeline_mode = #tpu.pipeline_mode<synchronous>, transform_indices = @transform_3, window_bounds = array<i64: 8, 128>}, {pipeline_mode = #tpu.pipeline_mode<synchronous>, transform_indices = @transform_4, window_bounds = array<i64: 8, 1>}, {transform_indices = @transform_5, window_bounds = array<i64: 8, 128>}]} {
    %c0 = arith.constant 0 : index
    %c0_0 = arith.constant 0 : index
    %0 = vector.load %arg1[%c0, %c0_0] : memref<4x128xf32, #tpu.memory_space<vmem>>, vector<4x128xf32>
    %c0_1 = arith.constant 0 : index
    %c0_2 = arith.constant 0 : index
    %1 = vector.load %arg2[%c0_1, %c0_2] : memref<128x4xf32, #tpu.memory_space<vmem>>, vector<128x4xf32>
    %c0_3 = arith.constant 0 : index
    %c0_4 = arith.constant 0 : index
    %2 = vector.load %arg3[%c0_3, %c0_4] : memref<128x1xf32, #tpu.memory_space<vmem>>, vector<128x1xf32>
    %3 = vector.shape_cast %2 : vector<128x1xf32> to vector<128x1xf32>
    %4 = vector.broadcast %3 : vector<128x1xf32> to vector<128x128xf32>
    %5 = vector.extract_strided_slice %1 {offsets = [0, 0], sizes = [128, 1], strides = [1, 1]} : vector<128x4xf32> to vector<128x1xf32>
    %6 = vector.extract_strided_slice %0 {offsets = [0, 0], sizes = [1, 128], strides = [1, 1]} : vector<4x128xf32> to vector<1x128xf32>
    %7 = vector.broadcast %5 : vector<128x1xf32> to vector<128x128xf32>
    %8 = vector.broadcast %6 : vector<1x128xf32> to vector<128x128xf32>
    %9 = arith.mulf %7, %8 : vector<128x128xf32>
    %10 = arith.addf %4, %9 : vector<128x128xf32>
    %11 = vector.extract_strided_slice %1 {offsets = [0, 1], sizes = [128, 1], strides = [1, 1]} : vector<128x4xf32> to vector<128x1xf32>
    %12 = vector.extract_strided_slice %0 {offsets = [1, 0], sizes = [1, 128], strides = [1, 1]} : vector<4x128xf32> to vector<1x128xf32>
    %13 = vector.broadcast %11 : vector<128x1xf32> to vector<128x128xf32>
    %14 = vector.broadcast %12 : vector<1x128xf32> to vector<128x128xf32>
    %15 = arith.mulf %13, %14 : vector<128x128xf32>
    %16 = arith.addf %10, %15 : vector<128x128xf32>
    %17 = vector.extract_strided_slice %1 {offsets = [0, 2], sizes = [128, 1], strides = [1, 1]} : vector<128x4xf32> to vector<128x1xf32>
    %18 = vector.extract_strided_slice %0 {offsets = [2, 0], sizes = [1, 128], strides = [1, 1]} : vector<4x128xf32> to vector<1x128xf32>
    %19 = vector.broadcast %17 : vector<128x1xf32> to vector<128x128xf32>
    %20 = vector.broadcast %18 : vector<1x128xf32> to vector<128x128xf32>
    %21 = arith.mulf %19, %20 : vector<128x128xf32>
    %22 = arith.addf %16, %21 : vector<128x128xf32>
    %23 = vector.extract_strided_slice %1 {offsets = [0, 3], sizes = [128, 1], strides = [1, 1]} : vector<128x4xf32> to vector<128x1xf32>
    %24 = vector.extract_strided_slice %0 {offsets = [3, 0], sizes = [1, 128], strides = [1, 1]} : vector<4x128xf32> to vector<1x128xf32>
    %25 = vector.broadcast %23 : vector<128x1xf32> to vector<128x128xf32>
    %26 = vector.broadcast %24 : vector<1x128xf32> to vector<128x128xf32>
    %27 = arith.mulf %25, %26 : vector<128x128xf32>
    %28 = arith.addf %22, %27 : vector<128x128xf32>
    %cst = arith.constant 0.000000e+00 : f32
    %29 = vector.broadcast %cst : f32 to vector<128x128xf32>
    %30 = arith.maximumf %28, %29 : vector<128x128xf32>
    %c0_5 = arith.constant 0 : index
    %c0_6 = arith.constant 0 : index
    %31 = vector.load %arg4[%c0_5, %c0_6] : memref<8x128xf32, #tpu.memory_space<vmem>>, vector<8x128xf32>
    %cst_7 = arith.constant dense<0.000000e+00> : vector<8x128xf32>
    %32 = tpu.matmul %31, %30, %cst_7 {dimension_numbers = #tpu.dot_dimension_numbers<[1], [0], [0], [1], [0, 0, 1, 1], [], []>} : vector<8x128xf32>, vector<128x128xf32>, vector<8x128xf32> -> vector<8x128xf32>
    %c0_8 = arith.constant 0 : index
    %c0_9 = arith.constant 0 : index
    %33 = vector.load %arg5[%c0_8, %c0_9] : memref<8x1xf32, #tpu.memory_space<vmem>>, vector<8x1xf32>
    %34 = vector.broadcast %33 : vector<8x1xf32> to vector<8x128xf32>
    %35 = arith.addf %32, %34 : vector<8x128xf32>
    %c0_10 = arith.constant 0 : index
    %c0_11 = arith.constant 0 : index
    %36 = vector.load %arg6[%c0_10, %c0_11] : memref<8x128xf32, #tpu.memory_space<vmem>>, vector<8x128xf32>
    tpu.vector_store %arg6[%c0_10, %c0_11], %35 {strides = array<i32>} : memref<8x128xf32, #tpu.memory_space<vmem>>, vector<8x128xf32>,
    return
  }
  func.func @transform_0(%arg0: i32) -> (i32, i32) {
    %c0_i32 = arith.constant 0 : i32
    %c0_i32_0 = arith.constant 0 : i32
    return %c0_i32, %arg0 : i32, i32
  }
  func.func @transform_1(%arg0: i32) -> (i32, i32) {
    %c0_i32 = arith.constant 0 : i32
    %c0_i32_0 = arith.constant 0 : i32
    %c0_i32_1 = arith.constant 0 : i32
    return %c0_i32, %c0_i32_0 : i32, i32
  }
  func.func @transform_2(%arg0: i32) -> (i32, i32) {
    %c0_i32 = arith.constant 0 : i32
    %c0_i32_0 = arith.constant 0 : i32
    %c0_i32_1 = arith.constant 0 : i32
    return %c0_i32, %c0_i32_0 : i32, i32
  }
  func.func @transform_3(%arg0: i32) -> (i32, i32) {
    %c0_i32 = arith.constant 0 : i32
    %c0_i32_0 = arith.constant 0 : i32
    %c0_i32_1 = arith.constant 0 : i32
    return %c0_i32, %c0_i32_0 : i32, i32
  }
  func.func @transform_4(%arg0: i32) -> (i32, i32) {
    %c0_i32 = arith.constant 0 : i32
    %c0_i32_0 = arith.constant 0 : i32
    %c0_i32_1 = arith.constant 0 : i32
    return %c0_i32, %c0_i32_0 : i32, i32
  }
  func.func @transform_5(%arg0: i32) -> (i32, i32) {
    %c0_i32 = arith.constant 0 : i32
    %c0_i32_0 = arith.constant 0 : i32
    return %c0_i32, %arg0 : i32, i32
  }
}

</mosaic_0001>

<llo_original>
// kernel: tpu_custom_call.1
$region0: #{tpu_custom_call.1}
  #allocation0 [shape = 'u32[]', space=smem, size = 0x4, offset = 0x4, fixed_abs, tag = 'smem constant byte address 0x4 - core index']
  #allocation1 [shape = 'u32[72,128]{1,0:T(1,128)}', space=vmem, size = 0x9000, scoped, tag = 'internal scratch']
  %s0 = inlined_call_operand.vmem [shape: f32[4,128], index: 0, kind: input, shape index: {}]
  %s1 = inlined_call_operand.vmem [shape: f32[128,4], index: 1, kind: input, shape index: {}]
  %s2 = inlined_call_operand.vmem [shape: f32[128,1], index: 2, kind: input, shape index: {}]
  %s3 = inlined_call_operand.vmem [shape: f32[8,128], index: 3, kind: input, shape index: {}]
  %s4 = inlined_call_operand.vmem [shape: f32[8,1], index: 4, kind: input, shape index: {}]
  %s5 = inlined_call_operand.hbm [shape: f32[8,128], index: 5, kind: output, shape index: {}]
  %s6 = sld [smem:[#allocation0]]
  $region30: #{tpu_custom_call.1} parent=0
    _
  %s8 = ssub.s32 1, %s6
  %s9 = scalar_select 0, %s8, %s6
  $region1: #{tpu_custom_call.1} parent=0
    #allocation2 [shape = 'u8[4096]{0}', space=vmem, size = 0x1000, scoped, tag = 'output window, operand 0, single buffered']
    #allocation3 [shape = 's32[1]{0}', space=sflag, size = 0x4, scoped, tag = 'scoped memory for tpu_custom_call.1']
    %10 = vsyncpa [#allocation3], 0
    // Predicated region
    $region2: #{tpu_custom_call.1} parent=1 // pred_check
      _
    $region3: #{tpu_custom_call.1} parent=1 // pred_check_branch
      %12 = sbr.rel (0) target = $region5
    $region4: #{tpu_custom_call.1} parent=1 // pred_region
      _
    $region5: #{tpu_custom_call.1} parent=1 // pred_fallthru
      _
    // Predicated region
    $region6: #{tpu_custom_call.1} parent=1 // pred_check
      _
    $region7: #{tpu_custom_call.1} parent=1 // pred_check_branch
      %14 = sbr.rel (0) target = $region9
    $region8: #{tpu_custom_call.1} parent=1 // pred_region
      _
    $region9: #{tpu_custom_call.1} parent=1 // pred_fallthru
      _
    // Predicated region
    $region10: #{tpu_custom_call.1} parent=1 // pred_check
      _
    $region11: #{tpu_custom_call.1} parent=1 // pred_check_branch
      %16 = sbr.rel (0) target = $region13
    $region12: #{tpu_custom_call.1} parent=1 // pred_region
      _
    $region13: #{tpu_custom_call.1} parent=1 // pred_fallthru
      _
    // Predicated region
    $region14: #{tpu_custom_call.1} parent=1 // pred_check
      _
    $region15: #{tpu_custom_call.1} parent=1 // pred_check_branch
      %18 = sbr.rel (0) target = $region17
    $region16: #{tpu_custom_call.1} parent=1 // pred_region
      _
    $region17: #{tpu_custom_call.1} parent=1 // pred_fallthru
      _
    // Predicated region
    $region18: #{tpu_custom_call.1} parent=1 // pred_check
      _
    $region19: #{tpu_custom_call.1} parent=1 // pred_check_branch
      %20 = sbr.rel (0) target = $region21
    $region20: #{tpu_custom_call.1} parent=1 // pred_region
      _
    $region21: #{tpu_custom_call.1} parent=1 // pred_fallthru
      _
    %v21 = vld [vmem:[%s0] sm:$0xf]
    %v22 = vld [vmem:[%s1] sm:$0xff]
    %v23 = vld [vmem:[%s1 + $0x8] sm:$0xff]
    %v24 = vld [vmem:[%s1 + $0x10] sm:$0xff]
    %v25 = vld [vmem:[%s1 + $0x18] sm:$0xff]
    %v26 = vld [vmem:[%s1 + $0x20] sm:$0xff]
    %v27 = vld [vmem:[%s1 + $0x28] sm:$0xff]
    %v28 = vld [vmem:[%s1 + $0x30] sm:$0xff]
    %v29 = vld [vmem:[%s1 + $0x38] sm:$0xff]
    %v30 = vld [vmem:[%s1 + $0x40] sm:$0xff]
    %v31 = vld [vmem:[%s1 + $0x48] sm:$0xff]
    %v32 = vld [vmem:[%s1 + $0x50] sm:$0xff]
    %v33 = vld [vmem:[%s1 + $0x58] sm:$0xff]
    %v34 = vld [vmem:[%s1 + $0x60] sm:$0xff]
    %v35 = vld [vmem:[%s1 + $0x68] sm:$0xff]
    %v36 = vld [vmem:[%s1 + $0x70] sm:$0xff]
    %v37 = vld [vmem:[%s1 + $0x78] sm:$0xff]
    %v38 = vld [vmem:[%s2] sm:$0xff]
    %v39 = vld [vmem:[%s2 + $0x8] sm:$0xff]
    %v40 = vld [vmem:[%s2 + $0x10] sm:$0xff]
    %v41 = vld [vmem:[%s2 + $0x18] sm:$0xff]
    %v42 = vld [vmem:[%s2 + $0x20] sm:$0xff]
    %v43 = vld [vmem:[%s2 + $0x28] sm:$0xff]
    %v44 = vld [vmem:[%s2 + $0x30] sm:$0xff]
    %v45 = vld [vmem:[%s2 + $0x38] sm:$0xff]
    %v46 = vld [vmem:[%s2 + $0x40] sm:$0xff]
    %v47 = vld [vmem:[%s2 + $0x48] sm:$0xff]
    %v48 = vld [vmem:[%s2 + $0x50] sm:$0xff]
    %v49 = vld [vmem:[%s2 + $0x58] sm:$0xff]
    %v50 = vld [vmem:[%s2 + $0x60] sm:$0xff]
    %v51 = vld [vmem:[%s2 + $0x68] sm:$0xff]
    %v52 = vld [vmem:[%s2 + $0x70] sm:$0xff]
    %v53 = vld [vmem:[%s2 + $0x78] sm:$0xff]
    %55 = vset.pattern.permute.xlu0 0
    %56 = vperm.xlu0 %55, %v38
    %v57 = vpop.permute.xlu0 %56
    %60 = vset.pattern.permute.xlu0 0
    %61 = vperm.xlu0 %60, %v39
    %v62 = vpop.permute.xlu0 %61
    %65 = vset.pattern.permute.xlu0 0
    %66 = vperm.xlu0 %65, %v40
    %v67 = vpop.permute.xlu0 %66
    %70 = vset.pattern.permute.xlu0 0
    %71 = vperm.xlu0 %70, %v41
    %v72 = vpop.permute.xlu0 %71
    %75 = vset.pattern.permute.xlu0 0
    %76 = vperm.xlu0 %75, %v42
    %v77 = vpop.permute.xlu0 %76
    %80 = vset.pattern.permute.xlu0 0
    %81 = vperm.xlu0 %80, %v43
    %v82 = vpop.permute.xlu0 %81
    %85 = vset.pattern.permute.xlu0 0
    %86 = vperm.xlu0 %85, %v44
    %v87 = vpop.permute.xlu0 %86
    %90 = vset.pattern.permute.xlu0 0
    %91 = vperm.xlu0 %90, %v45
    %v92 = vpop.permute.xlu0 %91
    %95 = vset.pattern.permute.xlu0 0
    %96 = vperm.xlu0 %95, %v46
    %v97 = vpop.permute.xlu0 %96
    %100 = vset.pattern.permute.xlu0 0
    %101 = vperm.xlu0 %100, %v47
    %v102 = vpop.permute.xlu0 %101
    %105 = vset.pattern.permute.xlu0 0
    %106 = vperm.xlu0 %105, %v48
    %v107 = vpop.permute.xlu0 %106
    %110 = vset.pattern.permute.xlu0 0
    %111 = vperm.xlu0 %110, %v49
    %v112 = vpop.permute.xlu0 %111
    %115 = vset.pattern.permute.xlu0 0
    %116 = vperm.xlu0 %115, %v50
    %v117 = vpop.permute.xlu0 %116
    %120 = vset.pattern.permute.xlu0 0
    %121 = vperm.xlu0 %120, %v51
    %v122 = vpop.permute.xlu0 %121
    %125 = vset.pattern.permute.xlu0 0
    %126 = vperm.xlu0 %125, %v52
    %v127 = vpop.permute.xlu0 %126
    %130 = vset.pattern.permute.xlu0 0
    %131 = vperm.xlu0 %130, %v53
    %v132 = vpop.permute.xlu0 %131
    %135 = vset.pattern.permute.xlu0 0
    %136 = vperm.xlu0 %135, %v22
    %v137 = vpop.permute.xlu0 %136
    %140 = vset.pattern.permute.xlu0 0
    %141 = vperm.xlu0 %140, %v23
    %v142 = vpop.permute.xlu0 %141
    %145 = vset.pattern.permute.xlu0 0
    %146 = vperm.xlu0 %145, %v24
    %v147 = vpop.permute.xlu0 %146
    %150 = vset.pattern.permute.xlu0 0
    %151 = vperm.xlu0 %150, %v25
    %v152 = vpop.permute.xlu0 %151
    %155 = vset.pattern.permute.xlu0 0
    %156 = vperm.xlu0 %155, %v26
    %v157 = vpop.permute.xlu0 %156
    %160 = vset.pattern.permute.xlu0 0
    %161 = vperm.xlu0 %160, %v27
    %v162 = vpop.permute.xlu0 %161
    %165 = vset.pattern.permute.xlu0 0
    %166 = vperm.xlu0 %165, %v28
    %v167 = vpop.permute.xlu0 %166
    %170 = vset.pattern.permute.xlu0 0
    %171 = vperm.xlu0 %170, %v29
    %v172 = vpop.permute.xlu0 %171
    %175 = vset.pattern.permute.xlu0 0
    %176 = vperm.xlu0 %175, %v30
    %v177 = vpop.permute.xlu0 %176
    %180 = vset.pattern.permute.xlu0 0
    %181 = vperm.xlu0 %180, %v31
    %v182 = vpop.permute.xlu0 %181
    %185 = vset.pattern.permute.xlu0 0
    %186 = vperm.xlu0 %185, %v32
    %v187 = vpop.permute.xlu0 %186
    %190 = vset.pattern.permute.xlu0 0
    %191 = vperm.xlu0 %190, %v33
    %v192 = vpop.permute.xlu0 %191
    %195 = vset.pattern.permute.xlu0 0
    %196 = vperm.xlu0 %195, %v34
    %v197 = vpop.permute.xlu0 %196
    %200 = vset.pattern.permute.xlu0 0
    %201 = vperm.xlu0 %200, %v35
    %v202 = vpop.permute.xlu0 %201
    %205 = vset.pattern.permute.xlu0 0
    %206 = vperm.xlu0 %205, %v36
    %v207 = vpop.permute.xlu0 %206
    %210 = vset.pattern.permute.xlu0 0
    %211 = vperm.xlu0 %210, %v37
    %v212 = vpop.permute.xlu0 %211
    %v214 = vperm.slane %v21, 0
    %v215 = vmul.f32 %v137, %v214
    %v216 = vmul.f32 %v142, %v214
    %v217 = vmul.f32 %v147, %v214
    %v218 = vmul.f32 %v152, %v214
    %v219 = vmul.f32 %v157, %v214
    %v220 = vmul.f32 %v162, %v214
    %v221 = vmul.f32 %v167, %v214
    %v222 = vmul.f32 %v172, %v214
    %v223 = vmul.f32 %v177, %v214
    %v224 = vmul.f32 %v182, %v214
    %v225 = vmul.f32 %v187, %v214
    %v226 = vmul.f32 %v192, %v214
    %v227 = vmul.f32 %v197, %v214
    %v228 = vmul.f32 %v202, %v214
    %v229 = vmul.f32 %v207, %v214
    %v230 = vmul.f32 %v212, %v214
    %v231 = vadd.f32 %v57, %v215
    %v232 = vadd.f32 %v62, %v216
    %v233 = vadd.f32 %v67, %v217
    %v234 = vadd.f32 %v72, %v218
    %v235 = vadd.f32 %v77, %v219
    %v236 = vadd.f32 %v82, %v220
    %v237 = vadd.f32 %v87, %v221
    %v238 = vadd.f32 %v92, %v222
    %v239 = vadd.f32 %v97, %v223
    %v240 = vadd.f32 %v102, %v224
    %v241 = vadd.f32 %v107, %v225
    %v242 = vadd.f32 %v112, %v226
    %v243 = vadd.f32 %v117, %v227
    %v244 = vadd.f32 %v122, %v228
    %v245 = vadd.f32 %v127, %v229
    %v246 = vadd.f32 %v132, %v230
    %247 = vset.pattern.permute.xlu0 1
    %248 = vperm.xlu0 %247, %v22
    %v249 = vpop.permute.xlu0 %248
    %251 = vset.pattern.permute.xlu0 1
    %252 = vperm.xlu0 %251, %v23
    %v253 = vpop.permute.xlu0 %252
    %255 = vset.pattern.permute.xlu0 1
    %256 = vperm.xlu0 %255, %v24
    %v257 = vpop.permute.xlu0 %256
    %259 = vset.pattern.permute.xlu0 1
    %260 = vperm.xlu0 %259, %v25
    %v261 = vpop.permute.xlu0 %260
    %263 = vset.pattern.permute.xlu0 1
    %264 = vperm.xlu0 %263, %v26
    %v265 = vpop.permute.xlu0 %264
    %267 = vset.pattern.permute.xlu0 1
    %268 = vperm.xlu0 %267, %v27
    %v269 = vpop.permute.xlu0 %268
    %271 = vset.pattern.permute.xlu0 1
    %272 = vperm.xlu0 %271, %v28
    %v273 = vpop.permute.xlu0 %272
    %275 = vset.pattern.permute.xlu0 1
    %276 = vperm.xlu0 %275, %v29
    %v277 = vpop.permute.xlu0 %276
    %279 = vset.pattern.permute.xlu0 1
    %280 = vperm.xlu0 %279, %v30
    %v281 = vpop.permute.xlu0 %280
    %283 = vset.pattern.permute.xlu0 1
    %284 = vperm.xlu0 %283, %v31
    %v285 = vpop.permute.xlu0 %284
    %287 = vset.pattern.permute.xlu0 1
    %288 = vperm.xlu0 %287, %v32
    %v289 = vpop.permute.xlu0 %288
    %291 = vset.pattern.permute.xlu0 1
    %292 = vperm.xlu0 %291, %v33
    %v293 = vpop.permute.xlu0 %292
    %295 = vset.pattern.permute.xlu0 1
    %296 = vperm.xlu0 %295, %v34
    %v297 = vpop.permute.xlu0 %296
    %299 = vset.pattern.permute.xlu0 1
    %300 = vperm.xlu0 %299, %v35
    %v301 = vpop.permute.xlu0 %300
    %303 = vset.pattern.permute.xlu0 1
    %304 = vperm.xlu0 %303, %v36
    %v305 = vpop.permute.xlu0 %304
    %307 = vset.pattern.permute.xlu0 1
    %308 = vperm.xlu0 %307, %v37
    %v309 = vpop.permute.xlu0 %308
    %v311 = vperm.slane %v21, 1
    %v312 = vmul.f32 %v249, %v311
    %v313 = vmul.f32 %v253, %v311
    %v314 = vmul.f32 %v257, %v311
    %v315 = vmul.f32 %v261, %v311
    %v316 = vmul.f32 %v265, %v311
    %v317 = vmul.f32 %v269, %v311
    %v318 = vmul.f32 %v273, %v311
    %v319 = vmul.f32 %v277, %v311
    %v320 = vmul.f32 %v281, %v311
    %v321 = vmul.f32 %v285, %v311
    %v322 = vmul.f32 %v289, %v311
    %v323 = vmul.f32 %v293, %v311
    %v324 = vmul.f32 %v297, %v311
    %v325 = vmul.f32 %v301, %v311
    %v326 = vmul.f32 %v305, %v311
    %v327 = vmul.f32 %v309, %v311
    %v328 = vadd.f32 %v231, %v312
    %v329 = vadd.f32 %v232, %v313
    %v330 = vadd.f32 %v233, %v314
    %v331 = vadd.f32 %v234, %v315
    %v332 = vadd.f32 %v235, %v316
    %v333 = vadd.f32 %v236, %v317
    %v334 = vadd.f32 %v237, %v318
    %v335 = vadd.f32 %v238, %v319
    %v336 = vadd.f32 %v239, %v320
    %v337 = vadd.f32 %v240, %v321
    %v338 = vadd.f32 %v241, %v322
    %v339 = vadd.f32 %v242, %v323
    %v340 = vadd.f32 %v243, %v324
    %v341 = vadd.f32 %v244, %v325
    %v342 = vadd.f32 %v245, %v326
    %v343 = vadd.f32 %v246, %v327
    %344 = vset.pattern.permute.xlu0 2
    %345 = vperm.xlu0 %344, %v22
    %v346 = vpop.permute.xlu0 %345
    %348 = vset.pattern.permute.xlu0 2
    %349 = vperm.xlu0 %348, %v23
    %v350 = vpop.permute.xlu0 %349
    %352 = vset.pattern.permute.xlu0 2
    %353 = vperm.xlu0 %352, %v24
    %v354 = vpop.permute.xlu0 %353
    %356 = vset.pattern.permute.xlu0 2
    %357 = vperm.xlu0 %356, %v25
    %v358 = vpop.permute.xlu0 %357
    %360 = vset.pattern.permute.xlu0 2
    %361 = vperm.xlu0 %360, %v26
    %v362 = vpop.permute.xlu0 %361
    %364 = vset.pattern.permute.xlu0 2
    %365 = vperm.xlu0 %364, %v27
    %v366 = vpop.permute.xlu0 %365
    %368 = vset.pattern.permute.xlu0 2
    %369 = vperm.xlu0 %368, %v28
    %v370 = vpop.permute.xlu0 %369
    %372 = vset.pattern.permute.xlu0 2
    %373 = vperm.xlu0 %372, %v29
    %v374 = vpop.permute.xlu0 %373
    %376 = vset.pattern.permute.xlu0 2
    %377 = vperm.xlu0 %376, %v30
    %v378 = vpop.permute.xlu0 %377
    %380 = vset.pattern.permute.xlu0 2
    %381 = vperm.xlu0 %380, %v31
    %v382 = vpop.permute.xlu0 %381
    %384 = vset.pattern.permute.xlu0 2
    %385 = vperm.xlu0 %384, %v32
    %v386 = vpop.permute.xlu0 %385
    %388 = vset.pattern.permute.xlu0 2
    %389 = vperm.xlu0 %388, %v33
    %v390 = vpop.permute.xlu0 %389
    %392 = vset.pattern.permute.xlu0 2
    %393 = vperm.xlu0 %392, %v34
    %v394 = vpop.permute.xlu0 %393
    %396 = vset.pattern.permute.xlu0 2
    %397 = vperm.xlu0 %396, %v35
    %v398 = vpop.permute.xlu0 %397
    %400 = vset.pattern.permute.xlu0 2
    %401 = vperm.xlu0 %400, %v36
    %v402 = vpop.permute.xlu0 %401
    %404 = vset.pattern.permute.xlu0 2
    %405 = vperm.xlu0 %404, %v37
    %v406 = vpop.permute.xlu0 %405
    %v408 = vperm.slane %v21, 2
    %v409 = vmul.f32 %v346, %v408
    %v410 = vmul.f32 %v350, %v408
    %v411 = vmul.f32 %v354, %v408
    %v412 = vmul.f32 %v358, %v408
    %v413 = vmul.f32 %v362, %v408
    %v414 = vmul.f32 %v366, %v408
    %v415 = vmul.f32 %v370, %v408
    %v416 = vmul.f32 %v374, %v408
    %v417 = vmul.f32 %v378, %v408
    %v418 = vmul.f32 %v382, %v408
    %v419 = vmul.f32 %v386, %v408
    %v420 = vmul.f32 %v390, %v408
    %v421 = vmul.f32 %v394, %v408
    %v422 = vmul.f32 %v398, %v408
    %v423 = vmul.f32 %v402, %v408
    %v424 = vmul.f32 %v406, %v408
    %v425 = vadd.f32 %v328, %v409
    %v426 = vadd.f32 %v329, %v410
    %v427 = vadd.f32 %v330, %v411
    %v428 = vadd.f32 %v331, %v412
    %v429 = vadd.f32 %v332, %v413
    %v430 = vadd.f32 %v333, %v414
    %v431 = vadd.f32 %v334, %v415
    %v432 = vadd.f32 %v335, %v416
    %v433 = vadd.f32 %v336, %v417
    %v434 = vadd.f32 %v337, %v418
    %v435 = vadd.f32 %v338, %v419
    %v436 = vadd.f32 %v339, %v420
    %v437 = vadd.f32 %v340, %v421
    %v438 = vadd.f32 %v341, %v422
    %v439 = vadd.f32 %v342, %v423
    %v440 = vadd.f32 %v343, %v424
    %441 = vset.pattern.permute.xlu0 3
    %442 = vperm.xlu0 %441, %v22
    %v443 = vpop.permute.xlu0 %442
    %445 = vset.pattern.permute.xlu0 3
    %446 = vperm.xlu0 %445, %v23
    %v447 = vpop.permute.xlu0 %446
    %449 = vset.pattern.permute.xlu0 3
    %450 = vperm.xlu0 %449, %v24
    %v451 = vpop.permute.xlu0 %450
    %453 = vset.pattern.permute.xlu0 3
    %454 = vperm.xlu0 %453, %v25
    %v455 = vpop.permute.xlu0 %454
    %457 = vset.pattern.permute.xlu0 3
    %458 = vperm.xlu0 %457, %v26
    %v459 = vpop.permute.xlu0 %458
    %461 = vset.pattern.permute.xlu0 3
    %462 = vperm.xlu0 %461, %v27
    %v463 = vpop.permute.xlu0 %462
    %465 = vset.pattern.permute.xlu0 3
    %466 = vperm.xlu0 %465, %v28
    %v467 = vpop.permute.xlu0 %466
    %469 = vset.pattern.permute.xlu0 3
    %470 = vperm.xlu0 %469, %v29
    %v471 = vpop.permute.xlu0 %470
    %473 = vset.pattern.permute.xlu0 3
    %474 = vperm.xlu0 %473, %v30
    %v475 = vpop.permute.xlu0 %474
    %477 = vset.pattern.permute.xlu0 3
    %478 = vperm.xlu0 %477, %v31
    %v479 = vpop.permute.xlu0 %478
    %481 = vset.pattern.permute.xlu0 3
    %482 = vperm.xlu0 %481, %v32
    %v483 = vpop.permute.xlu0 %482
    %485 = vset.pattern.permute.xlu0 3
    %486 = vperm.xlu0 %485, %v33
    %v487 = vpop.permute.xlu0 %486
    %489 = vset.pattern.permute.xlu0 3
    %490 = vperm.xlu0 %489, %v34
    %v491 = vpop.permute.xlu0 %490
    %493 = vset.pattern.permute.xlu0 3
    %494 = vperm.xlu0 %493, %v35
    %v495 = vpop.permute.xlu0 %494
    %497 = vset.pattern.permute.xlu0 3
    %498 = vperm.xlu0 %497, %v36
    %v499 = vpop.permute.xlu0 %498
    %501 = vset.pattern.permute.xlu0 3
    %502 = vperm.xlu0 %501, %v37
    %v503 = vpop.permute.xlu0 %502
    %v505 = vperm.slane %v21, 3
    %v506 = vmul.f32 %v443, %v505
    %v507 = vmul.f32 %v447, %v505
    %v508 = vmul.f32 %v451, %v505
    %v509 = vmul.f32 %v455, %v505
    %v510 = vmul.f32 %v459, %v505
    %v511 = vmul.f32 %v463, %v505
    %v512 = vmul.f32 %v467, %v505
    %v513 = vmul.f32 %v471, %v505
    %v514 = vmul.f32 %v475, %v505
    %v515 = vmul.f32 %v479, %v505
    %v516 = vmul.f32 %v483, %v505
    %v517 = vmul.f32 %v487, %v505
    %v518 = vmul.f32 %v491, %v505
    %v519 = vmul.f32 %v495, %v505
    %v520 = vmul.f32 %v499, %v505
    %v521 = vmul.f32 %v503, %v505
    %v522 = vadd.f32 %v425, %v506
    %v523 = vadd.f32 %v426, %v507
    %v524 = vadd.f32 %v427, %v508
    %v525 = vadd.f32 %v428, %v509
    %v526 = vadd.f32 %v429, %v510
    %v527 = vadd.f32 %v430, %v511
    %v528 = vadd.f32 %v431, %v512
    %v529 = vadd.f32 %v432, %v513
    %v530 = vadd.f32 %v433, %v514
    %v531 = vadd.f32 %v434, %v515
    %v532 = vadd.f32 %v435, %v516
    %v533 = vadd.f32 %v436, %v517
    %v534 = vadd.f32 %v437, %v518
    %v535 = vadd.f32 %v438, %v519
    %v536 = vadd.f32 %v439, %v520
    %v537 = vadd.f32 %v440, %v521
    %v538 = vmax.f32 %v522, 0.0
    %v539 = vmax.f32 %v523, 0.0
    %v540 = vmax.f32 %v524, 0.0
    %v541 = vmax.f32 %v525, 0.0
    %v542 = vmax.f32 %v526, 0.0
    %v543 = vmax.f32 %v527, 0.0
    %v544 = vmax.f32 %v528, 0.0
    %v545 = vmax.f32 %v529, 0.0
    %v546 = vmax.f32 %v530, 0.0
    %v547 = vmax.f32 %v531, 0.0
    %v548 = vmax.f32 %v532, 0.0
    %v549 = vmax.f32 %v533, 0.0
    %v550 = vmax.f32 %v534, 0.0
    %v551 = vmax.f32 %v535, 0.0
    %v552 = vmax.f32 %v536, 0.0
    %v553 = vmax.f32 %v537, 0.0
    %v554 = vld [vmem:[%s3] sm:$0xff]
    %v555 = vld [vmem:[%s4] sm:$0xff]
    %557 = vset.pattern.permute.xlu0 0
    %558 = vperm.xlu0 %557, %v555
    %v559 = vpop.permute.xlu0 %558
    %561 = vmatpush.msra.mxu0 %v553
    %562 = vmatpush.msra.mxu0 %v552
    %563 = vmatpush.msra.mxu0 %v551
    %564 = vmatpush.msra.mxu0 %v550
    %565 = vmatpush.msra.mxu0 %v549
    %566 = vmatpush.msra.mxu0 %v548
    %567 = vmatpush.msra.mxu0 %v547
    %568 = vmatpush.msra.mxu0 %v546
    %569 = vmatpush.msra.mxu0 %v545
    %570 = vmatpush.msra.mxu0 %v544
    %571 = vmatpush.msra.mxu0 %v543
    %572 = vmatpush.msra.mxu0 %v542
    %573 = vmatpush.msra.mxu0 %v541
    %574 = vmatpush.msra.mxu0 %v540
    %575 = vmatpush.msra.mxu0 %v539
    %576 = vmatpush.msra.mxu0 %v538
    %577 = vmatmul.f32.gmra.mxu0 %v554
    %v578 = vpop.f32.mrf.mxu0
    %v579 = vadd.f32 %v559, %v578
    %580 = vdwg.mxu0
    %581 = vst [vmem:[#allocation2] sm:$0xff] %v579
    // Predicated region
    $region22: #{tpu_custom_call.1} parent=1 // pred_check
      _
    $region23: #{tpu_custom_call.1} parent=1 // pred_check_branch
      %583 = sbr.rel (0) target = $region25
    $region24: #{tpu_custom_call.1} parent=1 // pred_region
      %585 = vsyncadd [#allocation3], 0
      %s587 = sshll.u32 [#allocation2], 4
      %s588 = int_to_ptr.vmem [resolvable:$true] %s587
      %s589 = sshll.u32 %s5, 4
      %s590 = int_to_ptr.hbm [resolvable:$true] %s589
      %592 = dma.vmem_to_hbm [thread:$0]  %s588, 128, %s590, [#allocation3]
    $region25: #{tpu_custom_call.1} parent=1 // pred_fallthru
      _
    // Predicated region
    $region26: #{tpu_custom_call.1} parent=1 // pred_check
      _
    $region27: #{tpu_custom_call.1} parent=1 // pred_check_branch
      %594 = sbr.rel (0) target = $region29
    $region28: #{tpu_custom_call.1} parent=1 // pred_region
      %596 = dma.done [#allocation3], 128
    $region29: #{tpu_custom_call.1} parent=1 // pred_fallthru
      _
    %597 = vsyncpa [#allocation3], 1

</llo_original>
